<compile_context>
chip_gen: v7x
topology: tpu7x:2x2x1
jax: 0.10.0
libtpu: 0.0.40
codegen_flags: <defaults>
</compile_context>

<pallas_src>
import jax
import jax.numpy as jnp
from jax.experimental import pallas as pl
from jax.experimental.pallas import tpu as pltpu


def _pe_kernel(x_ref, lpq_ref, wb_ref, o_ref, pos_ref):
    # x_ref  : (1, Ct, Mt)  input-dtype tile (batch k, channel tile i, spatial tile j)
    # lpq_ref: (2, Mt)      f32: row0 = linspace(-1,1,w)[p], row1 = linspace(-1,1,h)[q]
    # wb_ref : (Ct, 3)      f32 columns: [W[:,0], W[:,1], bias]
    # o_ref  : (1, Ct, Mt)  output tile
    # pos_ref: (Ct, Mt)     VMEM scratch (compute dtype), persists across batch axis

    # Batch is the innermost ("arbitrary") grid axis: compute the positional
    # tile once per (channel, spatial) tile and reuse it for all B batches.
    @pl.when(pl.program_id(2) == 0)
    def _():
        lpq = lpq_ref[...]                               # (2, Mt)  f32
        wb = wb_ref[...]                                 # (Ct, 3)  f32
        pos = (wb[:, 0:1] * lpq[0:1, :]
               + wb[:, 1:2] * lpq[1:2, :]
               + wb[:, 2:3])                             # (Ct, Mt) f32, VPU only
        pos_ref[...] = pos.astype(pos_ref.dtype)

    x = x_ref[0].astype(pos_ref.dtype)                   # (Ct, Mt) in compute dtype
    o_ref[0] = (x + pos_ref[...]).astype(o_ref.dtype)


def _chip_config():
    """Return (bf16_valu, block_target_bytes, vmem_limit_bytes) for local TPU."""
    try:
        kind = jax.devices()[0].device_kind.lower()
    except Exception:
        kind = ""
    if "v7" in kind:
        return True, 4 << 20, 48 << 20     # 64 MiB VMEM/TC: smaller blocks + cap
    if "v6" in kind:
        return True, 8 << 20, 64 << 20     # 128 MiB VMEM, bf16 VALU
    if "v5" in kind:
        return False, 8 << 20, 64 << 20    # 128 MiB VMEM, no bf16 VALU
    return False, 2 << 20, 32 << 20        # unknown chip: conservative defaults


def _choose_tiles(c, hw, itemsize, target_bytes):
    """Pick (c_tile, m_tile) for x blocks of shape (1, c_tile, m_tile)."""
    pack = max(8, 32 // itemsize)          # sublane packing: 8 f32, 16 bf16

    def largest_divisor(n, step, limit):
        best = None
        t = step
        while t <= min(n, limit):
            if n % t == 0:
                best = t
            t += step
        return best

    row_bytes = hw * itemsize
    if row_bytes <= target_bytes:
        # Preferred: fully contiguous (c_tile, hw) blocks — one long DMA each.
        max_rows = max(1, target_bytes // row_bytes)
        if c <= max_rows:
            return c, hw
        ct = largest_divisor(c, pack, max_rows)
        if ct is None:
            # No pack-multiple divisor fits the budget: use the smallest
            # pack-multiple divisor (keeps the sublane dim legal) or full C.
            t = pack
            while t < c and c % t != 0:
                t += pack
            ct = t if (t <= c and c % t == 0) else c
        return ct, hw

    # A single channel row alone exceeds the budget: tile the spatial dim.
    if hw % 128 == 0:
        max_m = max(128, target_bytes // max(1, c * itemsize))
        return c, (largest_divisor(hw, 128, max_m) or 128)
    # TODO(synk): cdiv grid + masked edge tiles for huge non-128-multiple hw.
    return c, hw


def positional_encoding_layer(x_nchw, weight, bias):
    """x_nchw: (B, C, H, W); weight: (C, 2); bias: (C,). Returns (B, C, H, W)."""
    b, c, h, w = x_nchw.shape
    assert h == w, "PyTorch module only broadcasts correctly when h == w"
    assert weight.shape == (c, 2) and bias.shape == (c,)

    bf16_valu, target_bytes, vmem_limit = _chip_config()
    itemsize = jnp.dtype(x_nchw.dtype).itemsize
    compute_dtype = (jnp.bfloat16
                     if (x_nchw.dtype == jnp.bfloat16 and bf16_valu)
                     else jnp.float32)

    hw = h * w
    x_flat = x_nchw.reshape(b, c, hw)                         # free view of NCHW

    # Flattened coordinates (m = p*w + q) packed into one (2, HW) f32 array.
    lin_w = jnp.linspace(-1.0, 1.0, w, dtype=jnp.float32)     # indexed by p
    lin_h = jnp.linspace(-1.0, 1.0, h, dtype=jnp.float32)     # indexed by q
    lpq = jnp.stack([jnp.repeat(lin_w, w), jnp.tile(lin_h, h)], axis=0)  # (2, HW)

    # Per-channel parameters packed into one (C, 3) array: [W[:,0], W[:,1], b].
    wb = jnp.concatenate(
        [weight.astype(jnp.float32), bias.reshape(c, 1).astype(jnp.float32)],
        axis=1)

    c_t, m_t = _choose_tiles(c, hw, itemsize, target_bytes)
    n_c, n_m = c // c_t, hw // m_t

    out_flat = pl.pallas_call(
        _pe_kernel,
        out_shape=jax.ShapeDtypeStruct((b, c, hw), x_nchw.dtype),
        grid=(n_c, n_m, b),                                   # batch innermost
        in_specs=[
            pl.BlockSpec((1, c_t, m_t), lambda i, j, k: (k, i, j)),   # x tile
            pl.BlockSpec((2, m_t), lambda i, j, k: (0, j)),           # lp/lq
            pl.BlockSpec((c_t, 3), lambda i, j, k: (i, 0)),           # [w0,w1,b]
        ],
        out_specs=pl.BlockSpec((1, c_t, m_t), lambda i, j, k: (k, i, j)),
        scratch_shapes=[pltpu.VMEM((c_t, m_t), compute_dtype)],
        compiler_params=pltpu.CompilerParams(
            dimension_semantics=("parallel", "parallel", "arbitrary"),
            vmem_limit_bytes=vmem_limit,
        ),
    )(x_flat, lpq, wb)

    return out_flat.reshape(b, c, h, w)                       # free view back


def _reference(x_nchw, weight, bias):
    """Pure-JAX reference mirroring the PyTorch forward exactly."""
    lin_w = jnp.linspace(-1.0, 1.0, x_nchw.shape[3], dtype=jnp.float32)
    lin_h = jnp.linspace(-1.0, 1.0, x_nchw.shape[2], dtype=jnp.float32)
    grid_x, grid_y = jnp.meshgrid(lin_w, lin_h, indexing="ij")    # (w, h)
    pos_encoding = jnp.stack([grid_x, grid_y], axis=-1)           # (w, h, 2)
    pos_embed = pos_encoding @ weight.T + bias                    # (w, h, c)
    pos_embed = jnp.transpose(pos_embed, (2, 0, 1))[None]         # (1, c, w, h)
    return (x_nchw.astype(jnp.float32) + pos_embed).astype(x_nchw.dtype)


if __name__ == "__main__":
    key = jax.random.PRNGKey(0)
    kx, kw, kb = jax.random.split(key, 3)

    B, C, H, W = 2, 4, 16, 16          # dim == C, h == w (required by module)
    x = jax.random.normal(kx, (B, C, H, W), dtype=jnp.float32)

    # Deterministic Linear(2, C) init (PyTorch-style uniform(-1/sqrt(2), 1/sqrt(2))).
    bound = 1.0 / jnp.sqrt(2.0)
    weight = jax.random.uniform(kw, (C, 2), jnp.float32, -bound, bound)
    bias = jax.random.uniform(kb, (C,), jnp.float32, -bound, bound)

    out = jax.block_until_ready(positional_encoding_layer(x, weight, bias))
    ref = _reference(x, weight, bias)
    assert out.shape == (B, C, H, W)
    assert out.dtype == x.dtype
    assert jnp.allclose(out, ref, atol=1e-5, rtol=1e-5), "mismatch vs f32 reference"

    # dtype-preserving path (bf16 in -> bf16 out; add in bf16 on v6e/v7x, f32 on v5e)
    x_bf16 = x.astype(jnp.bfloat16)
    out_bf16 = jax.block_until_ready(positional_encoding_layer(x_bf16, weight, bias))
    ref_bf16 = _reference(x_bf16, weight, bias)
    assert out_bf16.dtype == jnp.bfloat16
    assert jnp.allclose(out_bf16.astype(jnp.float32), ref_bf16.astype(jnp.float32),
                        atol=2e-2, rtol=2e-2), "mismatch vs bf16 reference"

    print("KERNEL_OK")
</pallas_src>

<mosaic_0001>
module attributes {stable_mosaic.version = 11 : i64} {
  func.func @_pe_kernel(%arg0: i32, %arg1: i32, %arg2: i32, %arg3: memref<1x4x256xf32, #tpu.memory_space<vmem>>, %arg4: memref<2x256xf32, #tpu.memory_space<vmem>>, %arg5: memref<4x3xf32, #tpu.memory_space<vmem>>, %arg6: memref<1x4x256xf32, #tpu.memory_space<vmem>>, %arg7: memref<4x256xf32, #tpu.memory_space<vmem>>) attributes {dimension_semantics = [#tpu.dimension_semantics<parallel>, #tpu.dimension_semantics<parallel>, #tpu.dimension_semantics<arbitrary>], iteration_bounds = array<i64: 1, 1, 2>, scalar_prefetch = 0 : i64, scratch_operands = 1 : i64, tpu.core_type = #tpu.core_type<tc>, window_params = [{transform_indices = @transform_0, window_bounds = array<i64: 1, 4, 256>}, {transform_indices = @transform_1, window_bounds = array<i64: 2, 256>}, {transform_indices = @transform_2, window_bounds = array<i64: 4, 3>}, {transform_indices = @transform_3, window_bounds = array<i64: 1, 4, 256>}]} {
    %c0_i32 = arith.constant 0 : i32
    %0 = arith.cmpi eq, %arg2, %c0_i32 : i32
    %1 = arith.extui %0 : i1 to i32
    %c0_i32_0 = arith.constant 0 : i32
    %2 = arith.cmpi ne, %1, %c0_i32_0 : i32
    scf.if %2 {
      %c0_8 = arith.constant 0 : index
      %c0_9 = arith.constant 0 : index
      %10 = vector.load %arg4[%c0_8, %c0_9] : memref<2x256xf32, #tpu.memory_space<vmem>>, vector<2x256xf32>
      %c0_10 = arith.constant 0 : index
      %c0_11 = arith.constant 0 : index
      %11 = vector.load %arg5[%c0_10, %c0_11] : memref<4x3xf32, #tpu.memory_space<vmem>>, vector<4x3xf32>
      %12 = vector.extract_strided_slice %11 {offsets = [0, 0], sizes = [4, 1], strides = [1, 1]} : vector<4x3xf32> to vector<4x1xf32>
      %13 = vector.extract_strided_slice %10 {offsets = [0, 0], sizes = [1, 256], strides = [1, 1]} : vector<2x256xf32> to vector<1x256xf32>
      %14 = vector.broadcast %12 : vector<4x1xf32> to vector<4x256xf32>
      %15 = vector.broadcast %13 : vector<1x256xf32> to vector<4x256xf32>
      %16 = arith.mulf %14, %15 : vector<4x256xf32>
      %17 = vector.extract_strided_slice %11 {offsets = [0, 1], sizes = [4, 1], strides = [1, 1]} : vector<4x3xf32> to vector<4x1xf32>
      %18 = vector.extract_strided_slice %10 {offsets = [1, 0], sizes = [1, 256], strides = [1, 1]} : vector<2x256xf32> to vector<1x256xf32>
      %19 = vector.broadcast %17 : vector<4x1xf32> to vector<4x256xf32>
      %20 = vector.broadcast %18 : vector<1x256xf32> to vector<4x256xf32>
      %21 = arith.mulf %19, %20 : vector<4x256xf32>
      %22 = arith.addf %16, %21 : vector<4x256xf32>
      %23 = vector.extract_strided_slice %11 {offsets = [0, 2], sizes = [4, 1], strides = [1, 1]} : vector<4x3xf32> to vector<4x1xf32>
      %24 = vector.broadcast %23 : vector<4x1xf32> to vector<4x256xf32>
      %25 = arith.addf %22, %24 : vector<4x256xf32>
      %c0_12 = arith.constant 0 : index
      %c0_13 = arith.constant 0 : index
      %26 = vector.load %arg7[%c0_12, %c0_13] : memref<4x256xf32, #tpu.memory_space<vmem>>, vector<4x256xf32>
      tpu.vector_store %arg7[%c0_12, %c0_13], %25 {strides = array<i32>} : memref<4x256xf32, #tpu.memory_space<vmem>>, vector<4x256xf32>,
    } else {
    }
    %c0 = arith.constant 0 : index
    %c0_1 = arith.constant 0 : index
    %c0_2 = arith.constant 0 : index
    %3 = vector.load %arg3[%c0, %c0_1, %c0_2] : memref<1x4x256xf32, #tpu.memory_space<vmem>>, vector<1x4x256xf32>
    %4 = vector.shape_cast %3 : vector<1x4x256xf32> to vector<4x256xf32>
    %c0_3 = arith.constant 0 : index
    %c0_4 = arith.constant 0 : index
    %5 = vector.load %arg7[%c0_3, %c0_4] : memref<4x256xf32, #tpu.memory_space<vmem>>, vector<4x256xf32>
    %6 = arith.addf %4, %5 : vector<4x256xf32>
    %c0_5 = arith.constant 0 : index
    %c0_6 = arith.constant 0 : index
    %c0_7 = arith.constant 0 : index
    %7 = vector.load %arg6[%c0_5, %c0_6, %c0_7] : memref<1x4x256xf32, #tpu.memory_space<vmem>>, vector<1x4x256xf32>
    %8 = vector.shape_cast %7 : vector<1x4x256xf32> to vector<4x256xf32>
    %9 = vector.shape_cast %6 : vector<4x256xf32> to vector<1x4x256xf32>
    tpu.vector_store %arg6[%c0_5, %c0_6, %c0_7], %9 {strides = array<i32>} : memref<1x4x256xf32, #tpu.memory_space<vmem>>, vector<1x4x256xf32>,
    return
  }
  func.func @transform_0(%arg0: i32, %arg1: i32, %arg2: i32) -> (i32, i32, i32) {
    %c0_i32 = arith.constant 0 : i32
    return %arg2, %arg0, %arg1 : i32, i32, i32
  }
  func.func @transform_1(%arg0: i32, %arg1: i32, %arg2: i32) -> (i32, i32) {
    %c0_i32 = arith.constant 0 : i32
    %c0_i32_0 = arith.constant 0 : i32
    return %c0_i32, %arg1 : i32, i32
  }
  func.func @transform_2(%arg0: i32, %arg1: i32, %arg2: i32) -> (i32, i32) {
    %c0_i32 = arith.constant 0 : i32
    %c0_i32_0 = arith.constant 0 : i32
    return %arg0, %c0_i32 : i32, i32
  }
  func.func @transform_3(%arg0: i32, %arg1: i32, %arg2: i32) -> (i32, i32, i32) {
    %c0_i32 = arith.constant 0 : i32
    return %arg2, %arg0, %arg1 : i32, i32, i32
  }
}

</mosaic_0001>

<llo_original>
// kernel: tpu_custom_call.1
$region0: #{tpu_custom_call.1}
  #allocation0 [shape = 'u32[]', space=smem, size = 0x4, offset = 0x4, fixed_abs, tag = 'smem constant byte address 0x4 - core index']
  #allocation1 [shape = 'u32[144,128]{1,0:T(1,128)}', space=vmem, size = 0x12000, scoped, tag = 'internal scratch']
  #allocation2 [shape = 'f32[4,256]{1,0:T(4,128)}', space=vmem, size = 0x1000, scoped, tag = 'scratch operand']
  %s0 = inlined_call_operand.hbm [shape: f32[2,4,256], index: 0, kind: input, shape index: {}]
  %s1 = inlined_call_operand.hbm [shape: f32[2,256], index: 1, kind: input, shape index: {}]
  %s2 = inlined_call_operand.vmem [shape: f32[4,3], index: 2, kind: input, shape index: {}]
  %s3 = inlined_call_operand.hbm [shape: f32[2,4,256], index: 3, kind: output, shape index: {}]
  %s4 = sld [smem:[#allocation0]]
  $region57: #{tpu_custom_call.1} parent=0
    _
  %s6 = ssub.s32 1, %s4
  %s7 = scalar_select 0, %s6, %s4
  $region1: #{tpu_custom_call.1} parent=0
    #allocation3 [shape = 'u8[8192]{0}', space=vmem, size = 0x2000, scoped, tag = 'input window, operand 0']
    #allocation4 [shape = 's32[2]{0}', space=sflag, size = 0x8, scoped, tag = 'scoped memory for tpu_custom_call.1']
    #allocation5 [shape = 's32[2]{0}', space=sflag, size = 0x8, scoped, tag = 'scoped memory for tpu_custom_call.1']
    #allocation6 [shape = 'u8[2048]{0}', space=vmem, size = 0x800, scoped, tag = 'input window, operand 1, single buffered']
    #allocation7 [shape = 's32[1]{0}', space=sflag, size = 0x4, scoped, tag = 'scoped memory for tpu_custom_call.1']
    #allocation8 [shape = 'u8[8192]{0}', space=vmem, size = 0x2000, scoped, tag = 'output window, operand 0']
    %8 = vsyncpa [#allocation4], 0
    %s9 = scalar_lea.sflag [#allocation4], 1
    %10 = vsyncpa %s9, 0
    %11 = vsyncpa [#allocation7], 0
    %12 = vsyncpa [#allocation5], 0
    %s13 = scalar_lea.sflag [#allocation5], 1
    %14 = vsyncpa %s13, 0
    loop: start=0, step=1, limit=4
    $region2: #{tpu_custom_call.1} parent=1 // loop_pre_header
      _
    $region3: #{tpu_custom_call.1} parent=1 // loop_header
      %s16 = sphi 0, %s20
      %p17 = scmp.ge.s32.totalorder %s16, 4
      %s23 = sphi 0, %s42
      %s24 = sphi 0, %s38
      %s25 = sphi 0, %s34
      %s26 = sphi 0, %s23
      %s27 = sphi 0, %s24
      %s28 = sphi 0, %s25
      %s29 = sphi 0, %s26
      %s30 = sphi 0, %s27
      %s31 = sphi 0, %s28
      %s49 = sphi 0, %s51
      %s52 = sphi 0, %s49
      %s53 = sphi 0, %s52
      %s69 = sphi 0, %s53
      %s75 = sphi 0, %s77
      %s78 = sphi 0, %s75
      %s79 = sphi 0, %s78
      %s95 = sphi 0, %s79
      %s101 = sphi 0, %s103
      %s104 = sphi 0, %s101
      %s105 = sphi 0, %s104
      %s121 = sphi 0, %s105
      %s131 = sphi 0, %s133
      %s134 = sphi 0, %s131
      %s135 = sphi 0, %s134
      %s151 = sphi 0, %s135
    $region4: #{tpu_custom_call.1} parent=1 // loop_header_branch
      %19 = sbr.rel (%p17) target = $region8
    $region5: #{tpu_custom_call.1} parent=1 // loop_body
      %s21 = ssub.s32 %s16, 1
      %s22 = ssub.s32 %s16, 2
      %s32 = sadd.s32 1, %s25
      %p33 = scmp.ge.s32.totalorder %s32, 2
      %s34 = scalar_select %p33, 0, %s32
      %s35 = sadd.s32 1, %s24
      %s36 = scalar_select %p33, %s35, %s24
      %p37 = scmp.ge.s32.totalorder %s36, 1
      %s38 = scalar_select %p37, 0, %s36
      %s39 = sadd.s32 1, %s23
      %s40 = scalar_select %p37, %s39, %s23
      %p41 = scmp.ge.s32.totalorder %s40, 1
      %s42 = scalar_select %p41, 0, %s40
      %s43 = ssub.s32 %s25, %s34
      %s44 = ssub.s32 %s23, %s42
      %s45 = sor.u32 %s43, %s44
      %s46 = ssub.s32 %s24, %s38
      %s47 = sor.u32 %s45, %s46
      %p48 = scmp.eq.s32.totalorder %s47, 0
      %s50 = sadd.s32 %s49, 1
      %s51 = scalar_select %p48, %s49, %s50
      %p54 = pneg %p48
      %p55 = scmp.eq.s32.totalorder %s16, 1
      %p56 = por %p54, %p55
      %p57 = scmp.ne.s32.totalorder %s49, %s52
      %p58 = scmp.eq.s32.totalorder %s16, 0
      %p59 = por %p57, %p58
      %p60 = scmp.ne.s32.totalorder %s49, %s52
      %p61 = scmp.eq.s32.totalorder %s21, 1
      %p62 = por %p60, %p61
      %p63 = scmp.ne.s32.totalorder %s52, %s53
      %p64 = scmp.eq.s32.totalorder %s21, 0
      %p65 = por %p63, %p64
      %p66 = scmp.ne.s32.totalorder %s52, %s53
      %p67 = scmp.eq.s32.totalorder %s22, 1
      %p68 = por %p66, %p67
      %p70 = scmp.ne.s32.totalorder %s53, %s69
      %p71 = scmp.eq.s32.totalorder %s22, 0
      %p72 = por %p70, %p71
      %s73 = ssub.s32 %s24, %s38
      %p74 = scmp.eq.s32.totalorder %s73, 0
      %s76 = sadd.s32 %s75, 1
      %s77 = scalar_select %p74, %s75, %s76
      %p80 = pneg %p74
      %p81 = scmp.eq.s32.totalorder %s16, 1
      %p82 = por %p80, %p81
      %p83 = scmp.ne.s32.totalorder %s75, %s78
      %p84 = scmp.eq.s32.totalorder %s16, 0
      %p85 = por %p83, %p84
      %p86 = scmp.ne.s32.totalorder %s75, %s78
      %p87 = scmp.eq.s32.totalorder %s21, 1
      %p88 = por %p86, %p87
      %p89 = scmp.ne.s32.totalorder %s78, %s79
      %p90 = scmp.eq.s32.totalorder %s21, 0
      %p91 = por %p89, %p90
      %p92 = scmp.ne.s32.totalorder %s78, %s79
      %p93 = scmp.eq.s32.totalorder %s22, 1
      %p94 = por %p92, %p93
      %p96 = scmp.ne.s32.totalorder %s79, %s95
      %p97 = scmp.eq.s32.totalorder %s22, 0
      %p98 = por %p96, %p97
      %s99 = ssub.s32 %s23, %s42
      %p100 = scmp.eq.s32.totalorder %s99, 0
      %s102 = sadd.s32 %s101, 1
      %s103 = scalar_select %p100, %s101, %s102
      %p106 = pneg %p100
      %p107 = scmp.eq.s32.totalorder %s16, 1
      %p108 = por %p106, %p107
      %p109 = scmp.ne.s32.totalorder %s101, %s104
      %p110 = scmp.eq.s32.totalorder %s16, 0
      %p111 = por %p109, %p110
      %p112 = scmp.ne.s32.totalorder %s101, %s104
      %p113 = scmp.eq.s32.totalorder %s21, 1
      %p114 = por %p112, %p113
      %p115 = scmp.ne.s32.totalorder %s104, %s105
      %p116 = scmp.eq.s32.totalorder %s21, 0
      %p117 = por %p115, %p116
      %p118 = scmp.ne.s32.totalorder %s104, %s105
      %p119 = scmp.eq.s32.totalorder %s22, 1
      %p120 = por %p118, %p119
      %p122 = scmp.ne.s32.totalorder %s105, %s121
      %p123 = scmp.eq.s32.totalorder %s22, 0
      %p124 = por %p122, %p123
      %s125 = ssub.s32 %s25, %s34
      %s126 = ssub.s32 %s23, %s42
      %s127 = sor.u32 %s125, %s126
      %s128 = ssub.s32 %s24, %s38
      %s129 = sor.u32 %s127, %s128
      %p130 = scmp.eq.s32.totalorder %s129, 0
      %s132 = sadd.s32 %s131, 1
      %s133 = scalar_select %p130, %s131, %s132
      %p136 = pneg %p130
      %p137 = scmp.eq.s32.totalorder %s16, 1
      %p138 = por %p136, %p137
      %p139 = scmp.ne.s32.totalorder %s131, %s134
      %p140 = scmp.eq.s32.totalorder %s16, 0
      %p141 = por %p139, %p140
      %p142 = scmp.ne.s32.totalorder %s131, %s134
      %p143 = scmp.eq.s32.totalorder %s21, 1
      %p144 = por %p142, %p143
      %p145 = scmp.ne.s32.totalorder %s134, %s135
      %p146 = scmp.eq.s32.totalorder %s21, 0
      %p147 = por %p145, %p146
      %p148 = scmp.ne.s32.totalorder %s134, %s135
      %p149 = scmp.eq.s32.totalorder %s22, 1
      %p150 = por %p148, %p149
      %p152 = scmp.ne.s32.totalorder %s135, %s151
      %p153 = scmp.eq.s32.totalorder %s22, 0
      %p154 = por %p152, %p153
      %p155 = scmp.le.s32.totalorder 1, %s16
      %p156 = scmp.lt.s32.totalorder %s16, 3
      %p157 = pnand %p155, %p156
      %p158 = pneg %p157
      // Predicated region
      $region9: #{tpu_custom_call.1} parent=5 // pred_check
        _
      $region10: #{tpu_custom_call.1} parent=5 // pred_check_branch
        %160 = sbr.rel (%p157) target = $region12
      $region11: #{tpu_custom_call.1} parent=5 // pred_region
        %s161 = ssub.s32 %s16, 1
        // Predicated region
        $region13: #{tpu_custom_call.1} parent=11 // pred_check
          %p162 = pneg %p91
        $region14: #{tpu_custom_call.1} parent=11 // pred_check_branch
          %164 = sbr.rel (%p162) target = $region16
        $region15: #{tpu_custom_call.1} parent=11 // pred_region
          %s165 = smul.u32 2, %s27
          %s167 = ssub.s32 64, 64
          %168 = vsyncadd [#allocation7], %s167
          %s169 = smul.addr %s165, 32
          %s170 = scalar_lea.hbm %s1, %s169
          %s172 = sshll.u32 [#allocation6], 4
          %s173 = int_to_ptr.vmem [resolvable:$true] %s172
          %175 = dma.hbm_to_vmem [thread:$0]  %s170, 64, %s173, [#allocation7]
        $region16: #{tpu_custom_call.1} parent=11 // pred_fallthru
          _
        // Predicated region
        $region17: #{tpu_custom_call.1} parent=11 // pred_check
          %p176 = pneg %p117
        $region18: #{tpu_custom_call.1} parent=11 // pred_check_branch
          %178 = sbr.rel (%p176) target = $region20
        $region19: #{tpu_custom_call.1} parent=11 // pred_region
          %p179 = scmp.lt.s32.totalorder %s26, 0
          %s180 = scalar_select %p179, %s26, 0
          %s181 = smul.addr %s180, 4
          %s182 = scalar_lea.vmem %s2, %s181
        $region20: #{tpu_custom_call.1} parent=11 // pred_fallthru
          _
      $region12: #{tpu_custom_call.1} parent=5 // pred_fallthru
        _
      %p183 = scmp.lt.s32.totalorder %s16, 2
      // Predicated region
      $region21: #{tpu_custom_call.1} parent=5 // pred_check
        %p184 = pneg %p183
      $region22: #{tpu_custom_call.1} parent=5 // pred_check_branch
        %186 = sbr.rel (%p184) target = $region24
      $region23: #{tpu_custom_call.1} parent=5 // pred_region
        // Predicated region
        $region25: #{tpu_custom_call.1} parent=23 // pred_check
          %p187 = pneg %p59
        $region26: #{tpu_custom_call.1} parent=23 // pred_check_branch
          %189 = sbr.rel (%p187) target = $region28
        $region27: #{tpu_custom_call.1} parent=23 // pred_region
          %s190 = sand.u32 %s49, 1
          %s191 = scalar_lea.sflag [#allocation4], %s190
          %s192 = sand.u32 %s49, 1
          %s193 = smul.addr %s192, 8
          %s194 = scalar_lea.vmem [#allocation3], %s193
          %s195 = smul.u32 2, %s24
          %s197 = ssub.s32 128, 128
          %198 = vsyncadd %s191, %s197
          %s199 = smul.addr %s23, 2
          %s200 = sadd.s32 %s195, %s199
          %s201 = smul.addr %s25, 2
          %s202 = sadd.s32 %s200, %s201
          %s203 = smul.addr %s202, 64
          %s204 = scalar_lea.hbm %s0, %s203
          %s206 = sshll.u32 %s194, 4
          %s207 = int_to_ptr.vmem [resolvable:$true] %s206
          %209 = dma.hbm_to_vmem [thread:$0]  %s204, 128, %s207, %s191
        $region28: #{tpu_custom_call.1} parent=23 // pred_fallthru
          _
      $region24: #{tpu_custom_call.1} parent=5 // pred_fallthru
        _
      %p210 = scmp.le.s32.totalorder 1, %s16
      %p211 = scmp.lt.s32.totalorder %s16, 3
      %p212 = pnand %p210, %p211
      %p213 = pneg %p212
      // Predicated region
      $region29: #{tpu_custom_call.1} parent=5 // pred_check
        _
      $region30: #{tpu_custom_call.1} parent=5 // pred_check_branch
        %215 = sbr.rel (%p212) target = $region32
      $region31: #{tpu_custom_call.1} parent=5 // pred_region
        %s216 = ssub.s32 %s16, 1
        %s217 = sand.u32 %s52, 1
        %s218 = scalar_lea.sflag [#allocation4], %s217
        %s219 = sand.u32 %s52, 1
        %s220 = smul.addr %s219, 8
        %s221 = scalar_lea.vmem [#allocation3], %s220
        // Predicated region
        $region33: #{tpu_custom_call.1} parent=31 // pred_check
          %p222 = pneg %p65
        $region34: #{tpu_custom_call.1} parent=31 // pred_check_branch
          %224 = sbr.rel (%p222) target = $region36
        $region35: #{tpu_custom_call.1} parent=31 // pred_region
          %225 = dma.done %s218, 128
        $region36: #{tpu_custom_call.1} parent=31 // pred_fallthru
          _
        // Predicated region
        $region37: #{tpu_custom_call.1} parent=31 // pred_check
          %p226 = pneg %p91
        $region38: #{tpu_custom_call.1} parent=31 // pred_check_branch
          %228 = sbr.rel (%p226) target = $region40
        $region39: #{tpu_custom_call.1} parent=31 // pred_region
          %229 = dma.done [#allocation7], 64
        $region40: #{tpu_custom_call.1} parent=31 // pred_fallthru
          _
        %s230 = sand.u32 %s52, 1
        %s231 = scalar_lea.sflag [#allocation4], %s230
        %s232 = sand.u32 %s52, 1
        %s233 = smul.addr %s232, 8
        %s234 = scalar_lea.vmem [#allocation3], %s233
        %p235 = pneg %p65
        %p236 = pneg %p62
        %p237 = pneg %p91
        %p238 = pneg %p88
        %p239 = scmp.lt.s32.totalorder %s26, 0
        %s240 = scalar_select %p239, %s26, 0
        %s241 = smul.addr %s240, 4
        %s242 = scalar_lea.vmem %s2, %s241
        %p243 = pneg %p117
        %p244 = pneg %p114
        %p245 = pneg %p147
        %p246 = pneg %p144
        %s247 = sand.u32 %s134, 1
        %s248 = scalar_lea.sflag [#allocation5], %s247
        %s249 = sand.u32 %s134, 1
        %s250 = smul.addr %s249, 8
        %s251 = scalar_lea.vmem [#allocation8], %s250
        %s252 = smul.u32 2, %s27
        %s253 = smul.u32 2, %s27
        %p254 = scmp.lt.s32.totalorder %s26, 0
        %s255 = scalar_select %p254, %s26, 0
        %s256 = smul.addr %s255, 4
        %s257 = scalar_lea.vmem %s2, %s256
        %s258 = smul.u32 2, %s27
        %p259 = scmp.eq.s32.totalorder %s28, 0
        // Predicated region
        $region41: #{tpu_custom_call.1} parent=31 // pred_check
          %p260 = pneg %p259
        $region42: #{tpu_custom_call.1} parent=31 // pred_check_branch
          %262 = sbr.rel (%p260) target = $region44
        $region43: #{tpu_custom_call.1} parent=31 // pred_region
          %v263 = vld [vmem:[#allocation6] sm:$0xf]
          %v264 = vld [vmem:[%s257] sm:$0xf]
          %266 = vset.pattern.permute.xlu0 0
          %267 = vperm.xlu0 %266, %v264
          %v268 = vpop.permute.xlu0 %267
          %v271 = vlaneseq
          %v272 = vshrl.u32 %v271, 7
          %v273 = vsub.s32 0, %v272
          %v274 = vrot.slane %v263, %v273
          %v275 = vlaneseq
          %v276 = vshrl.u32 %v275, 7
          %v277 = vsub.s32 2, %v276
          %v278 = vrot.slane %v263, %v277
          %v281 = vlaneseq
          %v282 = vshrl.u32 %v281, 7
          %v283 = vsub.s32 0, %v282
          %v284 = vrot.slane %v274, %v283
          %v285 = vlaneseq
          %v286 = vshrl.u32 %v285, 7
          %v287 = vsub.s32 0, %v286
          %v288 = vrot.slane %v278, %v287
          %v289 = vmul.f32 %v268, %v284
          %v290 = vmul.f32 %v268, %v288
          %291 = vset.pattern.permute.xlu0 1
          %292 = vperm.xlu0 %291, %v264
          %v293 = vpop.permute.xlu0 %292
          %v295 = vlaneseq
          %v296 = vshrl.u32 %v295, 7
          %v297 = vsub.s32 1, %v296
          %v298 = vrot.slane %v263, %v297
          %v299 = vlaneseq
          %v300 = vshrl.u32 %v299, 7
          %v301 = vsub.s32 3, %v300
          %v302 = vrot.slane %v263, %v301
          %v305 = vlaneseq
          %v306 = vshrl.u32 %v305, 7
          %v307 = vsub.s32 1, %v306
          %v308 = vrot.slane %v298, %v307
          %v309 = vlaneseq
          %v310 = vshrl.u32 %v309, 7
          %v311 = vsub.s32 1, %v310
          %v312 = vrot.slane %v302, %v311
          %v313 = vmul.f32 %v293, %v308
          %v314 = vmul.f32 %v293, %v312
          %v315 = vadd.f32 %v289, %v313
          %v316 = vadd.f32 %v290, %v314
          %317 = vset.pattern.permute.xlu0 2
          %318 = vperm.xlu0 %317, %v264
          %v319 = vpop.permute.xlu0 %318
          %v321 = vadd.f32 %v315, %v319
          %v322 = vadd.f32 %v316, %v319
          %v325 = vcombine.low %v321, %v322
          %327 = vst [vmem:[#allocation2] sm:$0xff] %v325
        $region44: #{tpu_custom_call.1} parent=31 // pred_fallthru
          _
        %v328 = vld [vmem:[%s221] sm:$0xff]
        %v329 = vld [vmem:[#allocation2] sm:$0xff]
        %v330 = vadd.f32 %v328, %v329
        %331 = vst [vmem:[%s251] sm:$0xff] %v330
        %s332 = sand.u32 %s134, 1
        %s333 = scalar_lea.sflag [#allocation5], %s332
        %s334 = sand.u32 %s134, 1
        %s335 = smul.addr %s334, 8
        %s336 = scalar_lea.vmem [#allocation8], %s335
        // Predicated region
        $region45: #{tpu_custom_call.1} parent=31 // pred_check
          %p337 = pneg %p144
        $region46: #{tpu_custom_call.1} parent=31 // pred_check_branch
          %339 = sbr.rel (%p337) target = $region48
        $region47: #{tpu_custom_call.1} parent=31 // pred_region
          %s340 = smul.u32 2, %s27
          %s342 = ssub.s32 128, 128
          %343 = vsyncadd %s333, %s342
          %s344 = smul.addr %s26, 2
          %s345 = sadd.s32 %s340, %s344
          %s346 = smul.addr %s28, 2
          %s347 = sadd.s32 %s345, %s346
          %s348 = smul.addr %s347, 64
          %s349 = scalar_lea.hbm %s3, %s348
          %s351 = sshll.u32 %s336, 4
          %s352 = int_to_ptr.vmem [resolvable:$true] %s351
          %354 = dma.vmem_to_hbm [thread:$0]  %s352, 128, %s349, %s333
        $region48: #{tpu_custom_call.1} parent=31 // pred_fallthru
          _
      $region32: #{tpu_custom_call.1} parent=5 // pred_fallthru
        _
      %p355 = scmp.le.s32.totalorder 2, %s16
      // Predicated region
      $region49: #{tpu_custom_call.1} parent=5 // pred_check
        %p356 = pneg %p355
      $region50: #{tpu_custom_call.1} parent=5 // pred_check_branch
        %358 = sbr.rel (%p356) target = $region52
      $region51: #{tpu_custom_call.1} parent=5 // pred_region
        %s359 = ssub.s32 %s16, 2
        // Predicated region
        $region53: #{tpu_custom_call.1} parent=51 // pred_check
          %p360 = pneg %p150
        $region54: #{tpu_custom_call.1} parent=51 // pred_check_branch
          %362 = sbr.rel (%p360) target = $region56
        $region55: #{tpu_custom_call.1} parent=51 // pred_region
          %s363 = sand.u32 %s135, 1
          %s364 = scalar_lea.sflag [#allocation5], %s363
          %s365 = sand.u32 %s135, 1
          %s366 = smul.addr %s365, 8
          %s367 = scalar_lea.vmem [#allocation8], %s366
          %368 = dma.done %s364, 128
        $region56: #{tpu_custom_call.1} parent=51 // pred_fallthru
          _
      $region52: #{tpu_custom_call.1} parent=5 // pred_fallthru
        _
    $region6: #{tpu_custom_call.1} parent=1 // loop_footer
      %s20 = sadd.s32 1, %s16
    $region7: #{tpu_custom_call.1} parent=1 // loop_footer_branch
      %15 = sbr.rel target = $region3
    $region8: #{tpu_custom_call.1} parent=1 // loop_exit
      _
    %369 = vsyncpa [#allocation4], 1
    %s370 = scalar_lea.sflag [#allocation4], 1
    %371 = vsyncpa %s370, 1
    %372 = vsyncpa [#allocation7], 1
    %373 = vsyncpa [#allocation5], 1
    %s374 = scalar_lea.sflag [#allocation5], 1
    %375 = vsyncpa %s374, 1

</llo_original>
